<compile_context>
chip_gen: v7x
topology: tpu7x:2x2x1
jax: 0.10.0
libtpu: 0.0.40
codegen_flags: <defaults>
</compile_context>

<pallas_src>
import functools

import jax
import jax.numpy as jnp
import numpy as np
from jax.experimental import pallas as pl
from jax.experimental.pallas import tpu as pltpu

N = 16                  # H == W (square images, as FRC requires)
HW = N * N              # flattened image length
R = N // 2 + 1          # number of FRC rings (0 .. Nyquist)
BAND_LO = R // 3        # l // 3
BAND_HI = 2 * R // 3    # 2 * l // 3
BAND_LEN = BAND_HI - BAND_LO
MASK_COLS = 8           # ring-indicator columns, zero-padded to 8


def _cdiv(a, b):
    return -(-a // b)


def _round_up(a, m):
    return _cdiv(a, m) * m


# ---------------------------------------------------------------------------
# Deterministic constants (no learnable parameters in this module).
# ---------------------------------------------------------------------------
@functools.lru_cache(maxsize=None)
def _host_constants(n):
    """Split bf16 DFT weights and flattened ring indicators (host numpy)."""
    k = np.arange(n)
    ang = 2.0 * np.pi * np.outer(k, k) / n
    dre = np.cos(ang)
    dim = -np.sin(ang)                               # D[k,m] = exp(-2*pi*i*k*m/n)
    wre = np.kron(dre, dre) - np.kron(dim, dim)      # F_flat = W @ x_flat
    wim = np.kron(dre, dim) + np.kron(dim, dre)
    # Row-per-image orientation: x_row @ wt = [Re(F)_row | Im(F)_row].
    wt = np.hstack([wre.T, wim.T]).astype(np.float32)            # (HW, 2*HW)
    w_hi = wt.astype(jnp.bfloat16)                               # top 8 mantissa bits
    w_lo = (wt - np.asarray(w_hi, np.float32)).astype(jnp.bfloat16)
    # Contraction-stacked split weight: [x_hi | x_lo | x_hi] @ [W_hi; W_hi; W_lo].
    wsplit = np.concatenate([w_hi, w_hi, w_lo], axis=0)          # (3*HW, 2*HW) bf16

    fx = np.concatenate([np.arange(0, n // 2), np.arange(-n // 2, 0)]).astype(np.float64)
    ridx = np.round(np.sqrt(fx[:, None] ** 2 + fx[None, :] ** 2)).reshape(-1)
    mask = np.zeros((n * n, MASK_COLS), dtype=np.float32)
    for r in range(BAND_LEN):
        mask[:, r] = (ridx == (BAND_LO + r)).astype(np.float32)  # (HW, 8)
    return wsplit, mask


@functools.lru_cache(maxsize=None)
def _device_constants(n):
    wsplit, mask = _host_constants(n)
    return jnp.asarray(wsplit), jnp.asarray(mask)


# ---------------------------------------------------------------------------
# Pallas kernel: G image pairs per grid step, images on the sublane axis.
# ---------------------------------------------------------------------------
def frc_loss_kernel(x1_ref, x2_ref, wsplit_ref, mask_ref, out_ref, *, total_images):
    g = x1_ref.shape[0]                              # images per block (sublanes)

    # ---- 2-D DFT of both image blocks: a single bf16 MXU matmul.
    x = jnp.concatenate([x1_ref[...], x2_ref[...]], axis=0)       # (2g, HW) f32
    x_hi = x.astype(jnp.bfloat16)
    x_lo = (x - x_hi.astype(jnp.float32)).astype(jnp.bfloat16)    # exact two-term split
    x_cat = jnp.concatenate([x_hi, x_lo, x_hi], axis=1)           # (2g, 3*HW) bf16
    f = jnp.dot(x_cat, wsplit_ref[...],
                preferred_element_type=jnp.float32)               # (2g, 2*HW) f32

    f1re, f1im = f[:g, :HW], f[:g, HW:]
    f2re, f2im = f[g:, :HW], f[g:, HW:]

    # ---- all ring sums for all four spectral products: one f32 matmul.
    prod = jnp.concatenate([
        f1re * f2re + f1im * f2im,     # Re(F1 * conj(F2))
        f1im * f2re - f1re * f2im,     # Im(F1 * conj(F2))
        f1re * f1re + f1im * f1im,     # |F1|^2
        f2re * f2re + f2im * f2im,     # |F2|^2
    ], axis=0)                                                    # (4g, HW) f32
    s = jnp.dot(prod, mask_ref[...],
                preferred_element_type=jnp.float32)               # (4g, 8) f32
    s_cre, s_cim = s[:g], s[g:2 * g]
    s_p1, s_p2 = s[2 * g:3 * g], s[3 * g:]

    inv = jax.lax.rsqrt(s_p1 * s_p2)                 # EUP; inf on empty/padded rings
    fre = s_cre * inv
    fim = s_cim * inv
    per_ring = (fre - 1.0) ** 2 + fim * fim                       # (g, 8)

    # Zero-padded mask columns and padded (all-zero) image rows give 0*inf = NaN;
    # select them away (true select, keeps the reference's behaviour otherwise).
    ring_ok = jax.lax.broadcasted_iota(jnp.int32, (1, MASK_COLS), 1) < BAND_LEN
    row = jax.lax.broadcasted_iota(jnp.int32, (g, 1), 0)
    img_ok = (pl.program_id(0) * g + row) < total_images
    out_ref[...] = jnp.where(ring_ok & img_ok, per_ring, 0.0)


@jax.jit
def frc_loss(batch1, batch2):
    B, C, H, W = batch1.shape
    assert H == N and W == N, "kernel is specialized for square H == W == 16 images"
    total = B * C

    SUB = 8            # images live on the sublane axis -> pad granularity 8
    G_MAX = 512        # per-block cap: comfortable VMEM headroom on v5e/v6e/v7x
    total_pad = _round_up(total, SUB)
    num_blocks = _cdiv(total_pad, G_MAX)
    if total_pad >= 2 * SUB:
        num_blocks = max(num_blocks, 2)   # >= 2 grid steps: both v7x TensorCores
    G = _round_up(_cdiv(total_pad, num_blocks), SUB)
    num_blocks = _cdiv(total_pad, G)
    padded = num_blocks * G

    x1 = batch1.reshape(total, HW).astype(jnp.float32)   # contiguous; no transpose
    x2 = batch2.reshape(total, HW).astype(jnp.float32)
    if padded != total:
        x1 = jnp.pad(x1, ((0, padded - total), (0, 0)))
        x2 = jnp.pad(x2, ((0, padded - total), (0, 0)))

    wsplit, mask = _device_constants(N)
    kernel = functools.partial(frc_loss_kernel, total_images=total)

    per_ring = pl.pallas_call(
        kernel,
        out_shape=jax.ShapeDtypeStruct((padded, MASK_COLS), jnp.float32),
        grid_spec=pltpu.PrefetchScalarGridSpec(
            num_scalar_prefetch=0,
            grid=(num_blocks,),
            in_specs=[
                pl.BlockSpec((G, HW), lambda i: (i, 0)),
                pl.BlockSpec((G, HW), lambda i: (i, 0)),
                pl.BlockSpec((3 * HW, 2 * HW), lambda i: (0, 0)),   # resident constant
                pl.BlockSpec((HW, MASK_COLS), lambda i: (0, 0)),    # resident constant
            ],
            out_specs=pl.BlockSpec((G, MASK_COLS), lambda i: (i, 0)),
        ),
        compiler_params=pltpu.CompilerParams(
            dimension_semantics=("parallel",),
            vmem_limit_bytes=32 * 1024 * 1024,
        ),
    )(x1, x2, wsplit, mask)

    # nn.MSELoss over the (BAND_LEN, 2) slice per image, summed over batch*channels.
    return jnp.sum(per_ring) * (1.0 / (2 * BAND_LEN))


# ---------------------------------------------------------------------------
# Pure NumPy reference (mirrors the PyTorch forward semantics).
# ---------------------------------------------------------------------------
def frc_loss_ref(batch1, batch2):
    b1 = np.asarray(batch1, dtype=np.float64)
    b2 = np.asarray(batch2, dtype=np.float64)
    B, C, H, W = b1.shape
    fx = np.concatenate([np.arange(0, W // 2), np.arange(-W // 2, 0)]).astype(np.float64)
    idx = np.round(np.sqrt(fx[:, None] ** 2 + fx[None, :] ** 2))
    l = W // 2 + 1
    total = 0.0
    for b in range(B):
        for c in range(C):
            f1 = np.fft.fft2(b1[b, c])
            f2 = np.fft.fft2(b2[b, c])
            c12 = f1 * np.conj(f2)
            rows = []
            for r in range(l):
                m = idx == r
                cr = c12.real[m].sum()
                ci = c12.imag[m].sum()
                p1 = (np.abs(f1) ** 2)[m].sum()
                p2 = (np.abs(f2) ** 2)[m].sum()
                d = np.sqrt(p1 * p2)
                rows.append([cr / d, ci / d])
            frc = np.asarray(rows)                      # (l, 2) = (Re, Im) per ring
            sl = frc[l // 3: 2 * l // 3]
            tgt = np.stack([np.ones(sl.shape[0]), np.zeros(sl.shape[0])], -1)
            total += np.mean((sl - tgt) ** 2)
    return np.float32(total)


if __name__ == "__main__":
    key = jax.random.PRNGKey(0)
    k1, k2 = jax.random.split(key)
    B, C = 2, 4
    batch1 = jax.random.uniform(k1, (B, C, N, N), dtype=jnp.float32)
    batch2 = jax.random.uniform(k2, (B, C, N, N), dtype=jnp.float32)

    loss = frc_loss(batch1, batch2)
    loss = jax.block_until_ready(loss)

    ref = frc_loss_ref(batch1, batch2)
    assert np.allclose(np.asarray(loss), ref, rtol=1e-3, atol=1e-3), (float(loss), float(ref))
    print("KERNEL_OK")
</pallas_src>

<mosaic_0001>
module attributes {stable_mosaic.version = 11 : i64} {
  func.func @frc_loss_kernel(%arg0: i32, %arg1: memref<8x256xf32, #tpu.memory_space<vmem>>, %arg2: memref<8x256xf32, #tpu.memory_space<vmem>>, %arg3: memref<768x512xbf16, #tpu.memory_space<vmem>>, %arg4: memref<256x8xf32, #tpu.memory_space<vmem>>, %arg5: memref<8x8xf32, #tpu.memory_space<vmem>>) attributes {dimension_semantics = [#tpu.dimension_semantics<parallel>], iteration_bounds = array<i64: 1>, scalar_prefetch = 0 : i64, scratch_operands = 0 : i64, tpu.core_type = #tpu.core_type<tc>, window_params = [{transform_indices = @transform_0, window_bounds = array<i64: 8, 256>}, {transform_indices = @transform_1, window_bounds = array<i64: 8, 256>}, {pipeline_mode = #tpu.pipeline_mode<synchronous>, transform_indices = @transform_2, window_bounds = array<i64: 768, 512>}, {pipeline_mode = #tpu.pipeline_mode<synchronous>, transform_indices = @transform_3, window_bounds = array<i64: 256, 8>}, {transform_indices = @transform_4, window_bounds = array<i64: 8, 8>}]} {
    %c0 = arith.constant 0 : index
    %c0_0 = arith.constant 0 : index
    %0 = vector.load %arg1[%c0, %c0_0] : memref<8x256xf32, #tpu.memory_space<vmem>>, vector<8x256xf32>
    %c0_1 = arith.constant 0 : index
    %c0_2 = arith.constant 0 : index
    %1 = vector.load %arg2[%c0_1, %c0_2] : memref<8x256xf32, #tpu.memory_space<vmem>>, vector<8x256xf32>
    %2 = tpu.concatenate %0, %1 in 0 : vector<8x256xf32>, vector<8x256xf32> -> vector<16x256xf32>
    %3 = arith.truncf %2 : vector<16x256xf32> to vector<16x256xbf16>
    %4 = arith.extf %3 : vector<16x256xbf16> to vector<16x256xf32>
    %5 = arith.subf %2, %4 : vector<16x256xf32>
    %6 = arith.truncf %5 : vector<16x256xf32> to vector<16x256xbf16>
    %7 = tpu.concatenate %3, %6, %3 in 1 : vector<16x256xbf16>, vector<16x256xbf16>, vector<16x256xbf16> -> vector<16x768xbf16>
    %c0_3 = arith.constant 0 : index
    %c0_4 = arith.constant 0 : index
    %8 = vector.load %arg3[%c0_3, %c0_4] : memref<768x512xbf16, #tpu.memory_space<vmem>>, vector<768x512xbf16>
    %cst = arith.constant dense<0.000000e+00> : vector<16x512xf32>
    %9 = tpu.matmul %7, %8, %cst {dimension_numbers = #tpu.dot_dimension_numbers<[1], [0], [0], [1], [0, 0, 1, 1], [], []>} : vector<16x768xbf16>, vector<768x512xbf16>, vector<16x512xf32> -> vector<16x512xf32>
    %10 = vector.extract_strided_slice %9 {offsets = [0, 0], sizes = [8, 256], strides = [1, 1]} : vector<16x512xf32> to vector<8x256xf32>
    %11 = vector.extract_strided_slice %9 {offsets = [0, 256], sizes = [8, 256], strides = [1, 1]} : vector<16x512xf32> to vector<8x256xf32>
    %12 = vector.extract_strided_slice %9 {offsets = [8, 0], sizes = [8, 256], strides = [1, 1]} : vector<16x512xf32> to vector<8x256xf32>
    %13 = vector.extract_strided_slice %9 {offsets = [8, 256], sizes = [8, 256], strides = [1, 1]} : vector<16x512xf32> to vector<8x256xf32>
    %14 = arith.mulf %10, %12 : vector<8x256xf32>
    %15 = arith.mulf %11, %13 : vector<8x256xf32>
    %16 = arith.addf %14, %15 : vector<8x256xf32>
    %17 = arith.mulf %11, %12 : vector<8x256xf32>
    %18 = arith.mulf %10, %13 : vector<8x256xf32>
    %19 = arith.subf %17, %18 : vector<8x256xf32>
    %20 = arith.mulf %10, %10 : vector<8x256xf32>
    %21 = arith.mulf %11, %11 : vector<8x256xf32>
    %22 = arith.addf %20, %21 : vector<8x256xf32>
    %23 = arith.mulf %12, %12 : vector<8x256xf32>
    %24 = arith.mulf %13, %13 : vector<8x256xf32>
    %25 = arith.addf %23, %24 : vector<8x256xf32>
    %26 = tpu.concatenate %16, %19, %22, %25 in 0 : vector<8x256xf32>, vector<8x256xf32>, vector<8x256xf32>, vector<8x256xf32> -> vector<32x256xf32>
    %c0_5 = arith.constant 0 : index
    %c0_6 = arith.constant 0 : index
    %27 = vector.load %arg4[%c0_5, %c0_6] : memref<256x8xf32, #tpu.memory_space<vmem>>, vector<256x8xf32>
    %cst_7 = arith.constant dense<0.000000e+00> : vector<32x8xf32>
    %28 = tpu.matmul %26, %27, %cst_7 {dimension_numbers = #tpu.dot_dimension_numbers<[1], [0], [0], [1], [0, 0, 1, 1], [], []>} : vector<32x256xf32>, vector<256x8xf32>, vector<32x8xf32> -> vector<32x8xf32>
    %29 = vector.extract_strided_slice %28 {offsets = [0, 0], sizes = [8, 8], strides = [1, 1]} : vector<32x8xf32> to vector<8x8xf32>
    %30 = vector.extract_strided_slice %28 {offsets = [8, 0], sizes = [8, 8], strides = [1, 1]} : vector<32x8xf32> to vector<8x8xf32>
    %31 = vector.extract_strided_slice %28 {offsets = [16, 0], sizes = [8, 8], strides = [1, 1]} : vector<32x8xf32> to vector<8x8xf32>
    %32 = vector.extract_strided_slice %28 {offsets = [24, 0], sizes = [8, 8], strides = [1, 1]} : vector<32x8xf32> to vector<8x8xf32>
    %33 = arith.mulf %31, %32 : vector<8x8xf32>
    %34 = math.rsqrt %33 : vector<8x8xf32>
    %35 = arith.mulf %29, %34 : vector<8x8xf32>
    %36 = arith.mulf %30, %34 : vector<8x8xf32>
    %cst_8 = arith.constant 1.000000e+00 : f32
    %37 = vector.broadcast %cst_8 : f32 to vector<8x8xf32>
    %38 = arith.subf %35, %37 : vector<8x8xf32>
    %39 = arith.mulf %38, %38 : vector<8x8xf32>
    %40 = arith.mulf %36, %36 : vector<8x8xf32>
    %41 = arith.addf %39, %40 : vector<8x8xf32>
    %42 = tpu.iota {dimensions = array<i32: 1>} : vector<1x8xi32>
    %c3_i32 = arith.constant 3 : i32
    %43 = vector.broadcast %c3_i32 : i32 to vector<1x8xi32>
    %44 = arith.cmpi slt, %42, %43 : vector<1x8xi32>
    %45 = tpu.iota {dimensions = array<i32: 0>} : vector<8x1xi32>
    %c8_i32 = arith.constant 8 : i32
    %46 = arith.muli %arg0, %c8_i32 : i32
    %47 = vector.broadcast %46 : i32 to vector<8x1xi32>
    %48 = arith.addi %47, %45 : vector<8x1xi32>
    %c8_i32_9 = arith.constant 8 : i32
    %49 = vector.broadcast %c8_i32_9 : i32 to vector<8x1xi32>
    %50 = arith.cmpi slt, %48, %49 : vector<8x1xi32>
    %51 = vector.broadcast %44 : vector<1x8xi1> to vector<8x8xi1>
    %52 = vector.broadcast %50 : vector<8x1xi1> to vector<8x8xi1>
    %53 = arith.andi %51, %52 : vector<8x8xi1>
    %cst_10 = arith.constant 0.000000e+00 : f32
    %54 = vector.broadcast %cst_10 : f32 to vector<8x8xf32>
    %55 = arith.select %53, %41, %54 : vector<8x8xi1>, vector<8x8xf32>
    %c0_11 = arith.constant 0 : index
    %c0_12 = arith.constant 0 : index
    %56 = vector.load %arg5[%c0_11, %c0_12] : memref<8x8xf32, #tpu.memory_space<vmem>>, vector<8x8xf32>
    tpu.vector_store %arg5[%c0_11, %c0_12], %55 {strides = array<i32>} : memref<8x8xf32, #tpu.memory_space<vmem>>, vector<8x8xf32>,
    return
  }
  func.func @transform_0(%arg0: i32) -> (i32, i32) {
    %c0_i32 = arith.constant 0 : i32
    %c0_i32_0 = arith.constant 0 : i32
    return %arg0, %c0_i32 : i32, i32
  }
  func.func @transform_1(%arg0: i32) -> (i32, i32) {
    %c0_i32 = arith.constant 0 : i32
    %c0_i32_0 = arith.constant 0 : i32
    return %arg0, %c0_i32 : i32, i32
  }
  func.func @transform_2(%arg0: i32) -> (i32, i32) {
    %c0_i32 = arith.constant 0 : i32
    %c0_i32_0 = arith.constant 0 : i32
    %c0_i32_1 = arith.constant 0 : i32
    return %c0_i32, %c0_i32_0 : i32, i32
  }
  func.func @transform_3(%arg0: i32) -> (i32, i32) {
    %c0_i32 = arith.constant 0 : i32
    %c0_i32_0 = arith.constant 0 : i32
    %c0_i32_1 = arith.constant 0 : i32
    return %c0_i32, %c0_i32_0 : i32, i32
  }
  func.func @transform_4(%arg0: i32) -> (i32, i32) {
    %c0_i32 = arith.constant 0 : i32
    %c0_i32_0 = arith.constant 0 : i32
    return %arg0, %c0_i32 : i32, i32
  }
}

</mosaic_0001>

<llo_original>
// kernel: frc_loss.1
$region0: #{frc_loss.1}
  #allocation0 [shape = 'u32[]', space=smem, size = 0x4, offset = 0x4, fixed_abs, tag = 'smem constant byte address 0x4 - core index']
  #allocation1 [shape = 'u32[144,128]{1,0:T(1,128)}', space=vmem, size = 0x12000, scoped, tag = 'internal scratch']
  %s0 = inlined_call_operand.vmem [shape: f32[8,256], index: 0, kind: input, shape index: {}]
  %s1 = inlined_call_operand.vmem [shape: f32[8,256], index: 1, kind: input, shape index: {}]
  %s2 = inlined_call_operand.vmem [shape: bf16[768,512], index: 2, kind: input, shape index: {}]
  %s3 = inlined_call_operand.vmem [shape: f32[256,8], index: 3, kind: input, shape index: {}]
  %s4 = inlined_call_operand.vmem [shape: f32[8,8], index: 4, kind: output, shape index: {}]
  %s5 = sld [smem:[#allocation0]]
  $region26: #{frc_loss.1} parent=0
    _
  %s7 = ssub.s32 1, %s5
  %s8 = scalar_select 0, %s7, %s5
  // Predicated region
  $region2: #{frc_loss.1} parent=0 // pred_check
    _
  $region3: #{frc_loss.1} parent=0 // pred_check_branch
    %10 = sbr.rel (0) target = $region5
  $region4: #{frc_loss.1} parent=0 // pred_region
    _
  $region5: #{frc_loss.1} parent=0 // pred_fallthru
    _
  // Predicated region
  $region6: #{frc_loss.1} parent=0 // pred_check
    _
  $region7: #{frc_loss.1} parent=0 // pred_check_branch
    %12 = sbr.rel (0) target = $region9
  $region8: #{frc_loss.1} parent=0 // pred_region
    _
  $region9: #{frc_loss.1} parent=0 // pred_fallthru
    _
  // Predicated region
  $region10: #{frc_loss.1} parent=0 // pred_check
    _
  $region11: #{frc_loss.1} parent=0 // pred_check_branch
    %14 = sbr.rel (0) target = $region13
  $region12: #{frc_loss.1} parent=0 // pred_region
    _
  $region13: #{frc_loss.1} parent=0 // pred_fallthru
    _
  // Predicated region
  $region14: #{frc_loss.1} parent=0 // pred_check
    _
  $region15: #{frc_loss.1} parent=0 // pred_check_branch
    %16 = sbr.rel (0) target = $region17
  $region16: #{frc_loss.1} parent=0 // pred_region
    _
  $region17: #{frc_loss.1} parent=0 // pred_fallthru
    _
  %v17 = vld [vmem:[%s0] sm:$0xff]
  %v18 = vld [vmem:[%s0 + $0x8] sm:$0xff]
  %v19 = vld [vmem:[%s1] sm:$0xff]
  %v20 = vld [vmem:[%s1 + $0x8] sm:$0xff]
  %v21 = vpack.c.bf16 %v19, %v17
  %v22 = vpack.c.bf16 %v20, %v18
  %v23 = vunpack.c.l.bf16 %v21
  %v24 = vunpack.c.l.bf16 %v22
  %v25 = vunpack.c.h.bf16 %v21
  %v26 = vunpack.c.h.bf16 %v22
  %v27 = vsub.f32 %v17, %v23
  %v28 = vsub.f32 %v18, %v24
  %v29 = vsub.f32 %v19, %v25
  %v30 = vsub.f32 %v20, %v26
  %v31 = vpack.c.bf16 %v29, %v27
  %v32 = vpack.c.bf16 %v30, %v28
  %v33 = vld [vmem:[%s2] sm:$0xff]
  %v34 = vld [vmem:[%s2 + $0x8] sm:$0xff]
  %v35 = vld [vmem:[%s2 + $0x10] sm:$0xff]
  %v36 = vld [vmem:[%s2 + $0x18] sm:$0xff]
  %v37 = vld [vmem:[%s2 + $0x20] sm:$0xff]
  %v38 = vld [vmem:[%s2 + $0x28] sm:$0xff]
  %v39 = vld [vmem:[%s2 + $0x30] sm:$0xff]
  %v40 = vld [vmem:[%s2 + $0x38] sm:$0xff]
  %v41 = vld [vmem:[%s2 + $0x40] sm:$0xff]
  %v42 = vld [vmem:[%s2 + $0x48] sm:$0xff]
  %v43 = vld [vmem:[%s2 + $0x50] sm:$0xff]
  %v44 = vld [vmem:[%s2 + $0x58] sm:$0xff]
  %v45 = vld [vmem:[%s2 + $0x60] sm:$0xff]
  %v46 = vld [vmem:[%s2 + $0x68] sm:$0xff]
  %v47 = vld [vmem:[%s2 + $0x70] sm:$0xff]
  %v48 = vld [vmem:[%s2 + $0x78] sm:$0xff]
  %v49 = vld [vmem:[%s2 + $0x80] sm:$0xff]
  %v50 = vld [vmem:[%s2 + $0x88] sm:$0xff]
  %v51 = vld [vmem:[%s2 + $0x90] sm:$0xff]
  %v52 = vld [vmem:[%s2 + $0x98] sm:$0xff]
  %v53 = vld [vmem:[%s2 + $0xa0] sm:$0xff]
  %v54 = vld [vmem:[%s2 + $0xa8] sm:$0xff]
  %v55 = vld [vmem:[%s2 + $0xb0] sm:$0xff]
  %v56 = vld [vmem:[%s2 + $0xb8] sm:$0xff]
  %v57 = vld [vmem:[%s2 + $0xc0] sm:$0xff]
  %v58 = vld [vmem:[%s2 + $0xc8] sm:$0xff]
  %v59 = vld [vmem:[%s2 + $0xd0] sm:$0xff]
  %v60 = vld [vmem:[%s2 + $0xd8] sm:$0xff]
  %v61 = vld [vmem:[%s2 + $0xe0] sm:$0xff]
  %v62 = vld [vmem:[%s2 + $0xe8] sm:$0xff]
  %v63 = vld [vmem:[%s2 + $0xf0] sm:$0xff]
  %v64 = vld [vmem:[%s2 + $0xf8] sm:$0xff]
  %v65 = vld [vmem:[%s2 + $0x100] sm:$0xff]
  %v66 = vld [vmem:[%s2 + $0x108] sm:$0xff]
  %v67 = vld [vmem:[%s2 + $0x110] sm:$0xff]
  %v68 = vld [vmem:[%s2 + $0x118] sm:$0xff]
  %v69 = vld [vmem:[%s2 + $0x120] sm:$0xff]
  %v70 = vld [vmem:[%s2 + $0x128] sm:$0xff]
  %v71 = vld [vmem:[%s2 + $0x130] sm:$0xff]
  %v72 = vld [vmem:[%s2 + $0x138] sm:$0xff]
  %v73 = vld [vmem:[%s2 + $0x140] sm:$0xff]
  %v74 = vld [vmem:[%s2 + $0x148] sm:$0xff]
  %v75 = vld [vmem:[%s2 + $0x150] sm:$0xff]
  %v76 = vld [vmem:[%s2 + $0x158] sm:$0xff]
  %v77 = vld [vmem:[%s2 + $0x160] sm:$0xff]
  %v78 = vld [vmem:[%s2 + $0x168] sm:$0xff]
  %v79 = vld [vmem:[%s2 + $0x170] sm:$0xff]
  %v80 = vld [vmem:[%s2 + $0x178] sm:$0xff]
  %v81 = vld [vmem:[%s2 + $0x180] sm:$0xff]
  %v82 = vld [vmem:[%s2 + $0x188] sm:$0xff]
  %v83 = vld [vmem:[%s2 + $0x190] sm:$0xff]
  %v84 = vld [vmem:[%s2 + $0x198] sm:$0xff]
  %v85 = vld [vmem:[%s2 + $0x1a0] sm:$0xff]
  %v86 = vld [vmem:[%s2 + $0x1a8] sm:$0xff]
  %v87 = vld [vmem:[%s2 + $0x1b0] sm:$0xff]
  %v88 = vld [vmem:[%s2 + $0x1b8] sm:$0xff]
  %v89 = vld [vmem:[%s2 + $0x1c0] sm:$0xff]
  %v90 = vld [vmem:[%s2 + $0x1c8] sm:$0xff]
  %v91 = vld [vmem:[%s2 + $0x1d0] sm:$0xff]
  %v92 = vld [vmem:[%s2 + $0x1d8] sm:$0xff]
  %v93 = vld [vmem:[%s2 + $0x1e0] sm:$0xff]
  %v94 = vld [vmem:[%s2 + $0x1e8] sm:$0xff]
  %v95 = vld [vmem:[%s2 + $0x1f0] sm:$0xff]
  %v96 = vld [vmem:[%s2 + $0x1f8] sm:$0xff]
  %v97 = vld [vmem:[%s2 + $0x200] sm:$0xff]
  %v98 = vld [vmem:[%s2 + $0x208] sm:$0xff]
  %v99 = vld [vmem:[%s2 + $0x210] sm:$0xff]
  %v100 = vld [vmem:[%s2 + $0x218] sm:$0xff]
  %v101 = vld [vmem:[%s2 + $0x220] sm:$0xff]
  %v102 = vld [vmem:[%s2 + $0x228] sm:$0xff]
  %v103 = vld [vmem:[%s2 + $0x230] sm:$0xff]
  %v104 = vld [vmem:[%s2 + $0x238] sm:$0xff]
  %v105 = vld [vmem:[%s2 + $0x240] sm:$0xff]
  %v106 = vld [vmem:[%s2 + $0x248] sm:$0xff]
  %v107 = vld [vmem:[%s2 + $0x250] sm:$0xff]
  %v108 = vld [vmem:[%s2 + $0x258] sm:$0xff]
  %v109 = vld [vmem:[%s2 + $0x260] sm:$0xff]
  %v110 = vld [vmem:[%s2 + $0x268] sm:$0xff]
  %v111 = vld [vmem:[%s2 + $0x270] sm:$0xff]
  %v112 = vld [vmem:[%s2 + $0x278] sm:$0xff]
  %v113 = vld [vmem:[%s2 + $0x280] sm:$0xff]
  %v114 = vld [vmem:[%s2 + $0x288] sm:$0xff]
  %v115 = vld [vmem:[%s2 + $0x290] sm:$0xff]
  %v116 = vld [vmem:[%s2 + $0x298] sm:$0xff]
  %v117 = vld [vmem:[%s2 + $0x2a0] sm:$0xff]
  %v118 = vld [vmem:[%s2 + $0x2a8] sm:$0xff]
  %v119 = vld [vmem:[%s2 + $0x2b0] sm:$0xff]
  %v120 = vld [vmem:[%s2 + $0x2b8] sm:$0xff]
  %v121 = vld [vmem:[%s2 + $0x2c0] sm:$0xff]
  %v122 = vld [vmem:[%s2 + $0x2c8] sm:$0xff]
  %v123 = vld [vmem:[%s2 + $0x2d0] sm:$0xff]
  %v124 = vld [vmem:[%s2 + $0x2d8] sm:$0xff]
  %v125 = vld [vmem:[%s2 + $0x2e0] sm:$0xff]
  %v126 = vld [vmem:[%s2 + $0x2e8] sm:$0xff]
  %v127 = vld [vmem:[%s2 + $0x2f0] sm:$0xff]
  %v128 = vld [vmem:[%s2 + $0x2f8] sm:$0xff]
  %v129 = vld [vmem:[%s2 + $0x300] sm:$0xff]
  %v130 = vld [vmem:[%s2 + $0x308] sm:$0xff]
  %v131 = vld [vmem:[%s2 + $0x310] sm:$0xff]
  %v132 = vld [vmem:[%s2 + $0x318] sm:$0xff]
  %v133 = vld [vmem:[%s2 + $0x320] sm:$0xff]
  %v134 = vld [vmem:[%s2 + $0x328] sm:$0xff]
  %v135 = vld [vmem:[%s2 + $0x330] sm:$0xff]
  %v136 = vld [vmem:[%s2 + $0x338] sm:$0xff]
  %v137 = vld [vmem:[%s2 + $0x340] sm:$0xff]
  %v138 = vld [vmem:[%s2 + $0x348] sm:$0xff]
  %v139 = vld [vmem:[%s2 + $0x350] sm:$0xff]
  %v140 = vld [vmem:[%s2 + $0x358] sm:$0xff]
  %v141 = vld [vmem:[%s2 + $0x360] sm:$0xff]
  %v142 = vld [vmem:[%s2 + $0x368] sm:$0xff]
  %v143 = vld [vmem:[%s2 + $0x370] sm:$0xff]
  %v144 = vld [vmem:[%s2 + $0x378] sm:$0xff]
  %v145 = vld [vmem:[%s2 + $0x380] sm:$0xff]
  %v146 = vld [vmem:[%s2 + $0x388] sm:$0xff]
  %v147 = vld [vmem:[%s2 + $0x390] sm:$0xff]
  %v148 = vld [vmem:[%s2 + $0x398] sm:$0xff]
  %v149 = vld [vmem:[%s2 + $0x3a0] sm:$0xff]
  %v150 = vld [vmem:[%s2 + $0x3a8] sm:$0xff]
  %v151 = vld [vmem:[%s2 + $0x3b0] sm:$0xff]
  %v152 = vld [vmem:[%s2 + $0x3b8] sm:$0xff]
  %v153 = vld [vmem:[%s2 + $0x3c0] sm:$0xff]
  %v154 = vld [vmem:[%s2 + $0x3c8] sm:$0xff]
  %v155 = vld [vmem:[%s2 + $0x3d0] sm:$0xff]
  %v156 = vld [vmem:[%s2 + $0x3d8] sm:$0xff]
  %v157 = vld [vmem:[%s2 + $0x3e0] sm:$0xff]
  %v158 = vld [vmem:[%s2 + $0x3e8] sm:$0xff]
  %v159 = vld [vmem:[%s2 + $0x3f0] sm:$0xff]
  %v160 = vld [vmem:[%s2 + $0x3f8] sm:$0xff]
  %v161 = vld [vmem:[%s2 + $0x400] sm:$0xff]
  %v162 = vld [vmem:[%s2 + $0x408] sm:$0xff]
  %v163 = vld [vmem:[%s2 + $0x410] sm:$0xff]
  %v164 = vld [vmem:[%s2 + $0x418] sm:$0xff]
  %v165 = vld [vmem:[%s2 + $0x420] sm:$0xff]
  %v166 = vld [vmem:[%s2 + $0x428] sm:$0xff]
  %v167 = vld [vmem:[%s2 + $0x430] sm:$0xff]
  %v168 = vld [vmem:[%s2 + $0x438] sm:$0xff]
  %v169 = vld [vmem:[%s2 + $0x440] sm:$0xff]
  %v170 = vld [vmem:[%s2 + $0x448] sm:$0xff]
  %v171 = vld [vmem:[%s2 + $0x450] sm:$0xff]
  %v172 = vld [vmem:[%s2 + $0x458] sm:$0xff]
  %v173 = vld [vmem:[%s2 + $0x460] sm:$0xff]
  %v174 = vld [vmem:[%s2 + $0x468] sm:$0xff]
  %v175 = vld [vmem:[%s2 + $0x470] sm:$0xff]
  %v176 = vld [vmem:[%s2 + $0x478] sm:$0xff]
  %v177 = vld [vmem:[%s2 + $0x480] sm:$0xff]
  %v178 = vld [vmem:[%s2 + $0x488] sm:$0xff]
  %v179 = vld [vmem:[%s2 + $0x490] sm:$0xff]
  %v180 = vld [vmem:[%s2 + $0x498] sm:$0xff]
  %v181 = vld [vmem:[%s2 + $0x4a0] sm:$0xff]
  %v182 = vld [vmem:[%s2 + $0x4a8] sm:$0xff]
  %v183 = vld [vmem:[%s2 + $0x4b0] sm:$0xff]
  %v184 = vld [vmem:[%s2 + $0x4b8] sm:$0xff]
  %v185 = vld [vmem:[%s2 + $0x4c0] sm:$0xff]
  %v186 = vld [vmem:[%s2 + $0x4c8] sm:$0xff]
  %v187 = vld [vmem:[%s2 + $0x4d0] sm:$0xff]
  %v188 = vld [vmem:[%s2 + $0x4d8] sm:$0xff]
  %v189 = vld [vmem:[%s2 + $0x4e0] sm:$0xff]
  %v190 = vld [vmem:[%s2 + $0x4e8] sm:$0xff]
  %v191 = vld [vmem:[%s2 + $0x4f0] sm:$0xff]
  %v192 = vld [vmem:[%s2 + $0x4f8] sm:$0xff]
  %v193 = vld [vmem:[%s2 + $0x500] sm:$0xff]
  %v194 = vld [vmem:[%s2 + $0x508] sm:$0xff]
  %v195 = vld [vmem:[%s2 + $0x510] sm:$0xff]
  %v196 = vld [vmem:[%s2 + $0x518] sm:$0xff]
  %v197 = vld [vmem:[%s2 + $0x520] sm:$0xff]
  %v198 = vld [vmem:[%s2 + $0x528] sm:$0xff]
  %v199 = vld [vmem:[%s2 + $0x530] sm:$0xff]
  %v200 = vld [vmem:[%s2 + $0x538] sm:$0xff]
  %v201 = vld [vmem:[%s2 + $0x540] sm:$0xff]
  %v202 = vld [vmem:[%s2 + $0x548] sm:$0xff]
  %v203 = vld [vmem:[%s2 + $0x550] sm:$0xff]
  %v204 = vld [vmem:[%s2 + $0x558] sm:$0xff]
  %v205 = vld [vmem:[%s2 + $0x560] sm:$0xff]
  %v206 = vld [vmem:[%s2 + $0x568] sm:$0xff]
  %v207 = vld [vmem:[%s2 + $0x570] sm:$0xff]
  %v208 = vld [vmem:[%s2 + $0x578] sm:$0xff]
  %v209 = vld [vmem:[%s2 + $0x580] sm:$0xff]
  %v210 = vld [vmem:[%s2 + $0x588] sm:$0xff]
  %v211 = vld [vmem:[%s2 + $0x590] sm:$0xff]
  %v212 = vld [vmem:[%s2 + $0x598] sm:$0xff]
  %v213 = vld [vmem:[%s2 + $0x5a0] sm:$0xff]
  %v214 = vld [vmem:[%s2 + $0x5a8] sm:$0xff]
  %v215 = vld [vmem:[%s2 + $0x5b0] sm:$0xff]
  %v216 = vld [vmem:[%s2 + $0x5b8] sm:$0xff]
  %v217 = vld [vmem:[%s2 + $0x5c0] sm:$0xff]
  %v218 = vld [vmem:[%s2 + $0x5c8] sm:$0xff]
  %v219 = vld [vmem:[%s2 + $0x5d0] sm:$0xff]
  %v220 = vld [vmem:[%s2 + $0x5d8] sm:$0xff]
  %v221 = vld [vmem:[%s2 + $0x5e0] sm:$0xff]
  %v222 = vld [vmem:[%s2 + $0x5e8] sm:$0xff]
  %v223 = vld [vmem:[%s2 + $0x5f0] sm:$0xff]
  %v224 = vld [vmem:[%s2 + $0x5f8] sm:$0xff]
  %v417 = vunpack.c.l.b16 %v33
  %v418 = vunpack.c.h.b16 %v33
  %v419 = vunpack.c.l.b16 %v34
  %v420 = vunpack.c.h.b16 %v34
  %v421 = vunpack.c.l.b16 %v35
  %v422 = vunpack.c.h.b16 %v35
  %v423 = vunpack.c.l.b16 %v36
  %v424 = vunpack.c.h.b16 %v36
  %v425 = vunpack.c.l.b16 %v37
  %v426 = vunpack.c.h.b16 %v37
  %v427 = vunpack.c.l.b16 %v38
  %v428 = vunpack.c.h.b16 %v38
  %v429 = vunpack.c.l.b16 %v39
  %v430 = vunpack.c.h.b16 %v39
  %v431 = vunpack.c.l.b16 %v40
  %v432 = vunpack.c.h.b16 %v40
  %v433 = vunpack.c.l.b16 %v41
  %v434 = vunpack.c.h.b16 %v41
  %v435 = vunpack.c.l.b16 %v42
  %v436 = vunpack.c.h.b16 %v42
  %v437 = vunpack.c.l.b16 %v43
  %v438 = vunpack.c.h.b16 %v43
  %v439 = vunpack.c.l.b16 %v44
  %v440 = vunpack.c.h.b16 %v44
  %v441 = vunpack.c.l.b16 %v45
  %v442 = vunpack.c.h.b16 %v45
  %v443 = vunpack.c.l.b16 %v46
  %v444 = vunpack.c.h.b16 %v46
  %v445 = vunpack.c.l.b16 %v47
  %v446 = vunpack.c.h.b16 %v47
  %v447 = vunpack.c.l.b16 %v48
  %v448 = vunpack.c.h.b16 %v48
  %v449 = vunpack.c.l.b16 %v49
  %v450 = vunpack.c.h.b16 %v49
  %v451 = vunpack.c.l.b16 %v50
  %v452 = vunpack.c.h.b16 %v50
  %v453 = vunpack.c.l.b16 %v51
  %v454 = vunpack.c.h.b16 %v51
  %v455 = vunpack.c.l.b16 %v52
  %v456 = vunpack.c.h.b16 %v52
  %v457 = vunpack.c.l.b16 %v53
  %v458 = vunpack.c.h.b16 %v53
  %v459 = vunpack.c.l.b16 %v54
  %v460 = vunpack.c.h.b16 %v54
  %v461 = vunpack.c.l.b16 %v55
  %v462 = vunpack.c.h.b16 %v55
  %v463 = vunpack.c.l.b16 %v56
  %v464 = vunpack.c.h.b16 %v56
  %v465 = vunpack.c.l.b16 %v57
  %v466 = vunpack.c.h.b16 %v57
  %v467 = vunpack.c.l.b16 %v58
  %v468 = vunpack.c.h.b16 %v58
  %v469 = vunpack.c.l.b16 %v59
  %v470 = vunpack.c.h.b16 %v59
  %v471 = vunpack.c.l.b16 %v60
  %v472 = vunpack.c.h.b16 %v60
  %v473 = vunpack.c.l.b16 %v61
  %v474 = vunpack.c.h.b16 %v61
  %v475 = vunpack.c.l.b16 %v62
  %v476 = vunpack.c.h.b16 %v62
  %v477 = vunpack.c.l.b16 %v63
  %v478 = vunpack.c.h.b16 %v63
  %v479 = vunpack.c.l.b16 %v64
  %v480 = vunpack.c.h.b16 %v64
  %v481 = vunpack.c.l.b16 %v65
  %v482 = vunpack.c.h.b16 %v65
  %v483 = vunpack.c.l.b16 %v66
  %v484 = vunpack.c.h.b16 %v66
  %v485 = vunpack.c.l.b16 %v67
  %v486 = vunpack.c.h.b16 %v67
  %v487 = vunpack.c.l.b16 %v68
  %v488 = vunpack.c.h.b16 %v68
  %v489 = vunpack.c.l.b16 %v69
  %v490 = vunpack.c.h.b16 %v69
  %v491 = vunpack.c.l.b16 %v70
  %v492 = vunpack.c.h.b16 %v70
  %v493 = vunpack.c.l.b16 %v71
  %v494 = vunpack.c.h.b16 %v71
  %v495 = vunpack.c.l.b16 %v72
  %v496 = vunpack.c.h.b16 %v72
  %v497 = vunpack.c.l.b16 %v73
  %v498 = vunpack.c.h.b16 %v73
  %v499 = vunpack.c.l.b16 %v74
  %v500 = vunpack.c.h.b16 %v74
  %v501 = vunpack.c.l.b16 %v75
  %v502 = vunpack.c.h.b16 %v75
  %v503 = vunpack.c.l.b16 %v76
  %v504 = vunpack.c.h.b16 %v76
  %v505 = vunpack.c.l.b16 %v77
  %v506 = vunpack.c.h.b16 %v77
  %v507 = vunpack.c.l.b16 %v78
  %v508 = vunpack.c.h.b16 %v78
  %v509 = vunpack.c.l.b16 %v79
  %v510 = vunpack.c.h.b16 %v79
  %v511 = vunpack.c.l.b16 %v80
  %v512 = vunpack.c.h.b16 %v80
  %v513 = vunpack.c.l.b16 %v81
  %v514 = vunpack.c.h.b16 %v81
  %v515 = vunpack.c.l.b16 %v82
  %v516 = vunpack.c.h.b16 %v82
  %v517 = vunpack.c.l.b16 %v83
  %v518 = vunpack.c.h.b16 %v83
  %v519 = vunpack.c.l.b16 %v84
  %v520 = vunpack.c.h.b16 %v84
  %v521 = vunpack.c.l.b16 %v85
  %v522 = vunpack.c.h.b16 %v85
  %v523 = vunpack.c.l.b16 %v86
  %v524 = vunpack.c.h.b16 %v86
  %v525 = vunpack.c.l.b16 %v87
  %v526 = vunpack.c.h.b16 %v87
  %v527 = vunpack.c.l.b16 %v88
  %v528 = vunpack.c.h.b16 %v88
  %v529 = vunpack.c.l.b16 %v89
  %v530 = vunpack.c.h.b16 %v89
  %v531 = vunpack.c.l.b16 %v90
  %v532 = vunpack.c.h.b16 %v90
  %v533 = vunpack.c.l.b16 %v91
  %v534 = vunpack.c.h.b16 %v91
  %v535 = vunpack.c.l.b16 %v92
  %v536 = vunpack.c.h.b16 %v92
  %v537 = vunpack.c.l.b16 %v93
  %v538 = vunpack.c.h.b16 %v93
  %v539 = vunpack.c.l.b16 %v94
  %v540 = vunpack.c.h.b16 %v94
  %v541 = vunpack.c.l.b16 %v95
  %v542 = vunpack.c.h.b16 %v95
  %v543 = vunpack.c.l.b16 %v96
  %v544 = vunpack.c.h.b16 %v96
  %v545 = vunpack.c.l.b16 %v97
  %v546 = vunpack.c.h.b16 %v97
  %v547 = vunpack.c.l.b16 %v98
  %v548 = vunpack.c.h.b16 %v98
  %v549 = vunpack.c.l.b16 %v99
  %v550 = vunpack.c.h.b16 %v99
  %v551 = vunpack.c.l.b16 %v100
  %v552 = vunpack.c.h.b16 %v100
  %v553 = vunpack.c.l.b16 %v101
  %v554 = vunpack.c.h.b16 %v101
  %v555 = vunpack.c.l.b16 %v102
  %v556 = vunpack.c.h.b16 %v102
  %v557 = vunpack.c.l.b16 %v103
  %v558 = vunpack.c.h.b16 %v103
  %v559 = vunpack.c.l.b16 %v104
  %v560 = vunpack.c.h.b16 %v104
  %v561 = vunpack.c.l.b16 %v105
  %v562 = vunpack.c.h.b16 %v105
  %v563 = vunpack.c.l.b16 %v106
  %v564 = vunpack.c.h.b16 %v106
  %v565 = vunpack.c.l.b16 %v107
  %v566 = vunpack.c.h.b16 %v107
  %v567 = vunpack.c.l.b16 %v108
  %v568 = vunpack.c.h.b16 %v108
  %v569 = vunpack.c.l.b16 %v109
  %v570 = vunpack.c.h.b16 %v109
  %v571 = vunpack.c.l.b16 %v110
  %v572 = vunpack.c.h.b16 %v110
  %v573 = vunpack.c.l.b16 %v111
  %v574 = vunpack.c.h.b16 %v111
  %v575 = vunpack.c.l.b16 %v112
  %v576 = vunpack.c.h.b16 %v112
  %v577 = vunpack.c.l.b16 %v113
  %v578 = vunpack.c.h.b16 %v113
  %v579 = vunpack.c.l.b16 %v114
  %v580 = vunpack.c.h.b16 %v114
  %v581 = vunpack.c.l.b16 %v115
  %v582 = vunpack.c.h.b16 %v115
  %v583 = vunpack.c.l.b16 %v116
  %v584 = vunpack.c.h.b16 %v116
  %v585 = vunpack.c.l.b16 %v117
  %v586 = vunpack.c.h.b16 %v117
  %v587 = vunpack.c.l.b16 %v118
  %v588 = vunpack.c.h.b16 %v118
  %v589 = vunpack.c.l.b16 %v119
  %v590 = vunpack.c.h.b16 %v119
  %v591 = vunpack.c.l.b16 %v120
  %v592 = vunpack.c.h.b16 %v120
  %v593 = vunpack.c.l.b16 %v121
  %v594 = vunpack.c.h.b16 %v121
  %v595 = vunpack.c.l.b16 %v122
  %v596 = vunpack.c.h.b16 %v122
  %v597 = vunpack.c.l.b16 %v123
  %v598 = vunpack.c.h.b16 %v123
  %v599 = vunpack.c.l.b16 %v124
  %v600 = vunpack.c.h.b16 %v124
  %v601 = vunpack.c.l.b16 %v125
  %v602 = vunpack.c.h.b16 %v125
  %v603 = vunpack.c.l.b16 %v126
  %v604 = vunpack.c.h.b16 %v126
  %v605 = vunpack.c.l.b16 %v127
  %v606 = vunpack.c.h.b16 %v127
  %v607 = vunpack.c.l.b16 %v128
  %v608 = vunpack.c.h.b16 %v128
  %v609 = vunpack.c.l.b16 %v129
  %v610 = vunpack.c.h.b16 %v129
  %v611 = vunpack.c.l.b16 %v130
  %v612 = vunpack.c.h.b16 %v130
  %v613 = vunpack.c.l.b16 %v131
  %v614 = vunpack.c.h.b16 %v131
  %v615 = vunpack.c.l.b16 %v132
  %v616 = vunpack.c.h.b16 %v132
  %v617 = vunpack.c.l.b16 %v133
  %v618 = vunpack.c.h.b16 %v133
  %v619 = vunpack.c.l.b16 %v134
  %v620 = vunpack.c.h.b16 %v134
  %v621 = vunpack.c.l.b16 %v135
  %v622 = vunpack.c.h.b16 %v135
  %v623 = vunpack.c.l.b16 %v136
  %v624 = vunpack.c.h.b16 %v136
  %v625 = vunpack.c.l.b16 %v137
  %v626 = vunpack.c.h.b16 %v137
  %v627 = vunpack.c.l.b16 %v138
  %v628 = vunpack.c.h.b16 %v138
  %v629 = vunpack.c.l.b16 %v139
  %v630 = vunpack.c.h.b16 %v139
  %v631 = vunpack.c.l.b16 %v140
  %v632 = vunpack.c.h.b16 %v140
  %v633 = vunpack.c.l.b16 %v141
  %v634 = vunpack.c.h.b16 %v141
  %v635 = vunpack.c.l.b16 %v142
  %v636 = vunpack.c.h.b16 %v142
  %v637 = vunpack.c.l.b16 %v143
  %v638 = vunpack.c.h.b16 %v143
  %v639 = vunpack.c.l.b16 %v144
  %v640 = vunpack.c.h.b16 %v144
  %v641 = vunpack.c.l.b16 %v145
  %v642 = vunpack.c.h.b16 %v145
  %v643 = vunpack.c.l.b16 %v146
  %v644 = vunpack.c.h.b16 %v146
  %v645 = vunpack.c.l.b16 %v147
  %v646 = vunpack.c.h.b16 %v147
  %v647 = vunpack.c.l.b16 %v148
  %v648 = vunpack.c.h.b16 %v148
  %v649 = vunpack.c.l.b16 %v149
  %v650 = vunpack.c.h.b16 %v149
  %v651 = vunpack.c.l.b16 %v150
  %v652 = vunpack.c.h.b16 %v150
  %v653 = vunpack.c.l.b16 %v151
  %v654 = vunpack.c.h.b16 %v151
  %v655 = vunpack.c.l.b16 %v152
  %v656 = vunpack.c.h.b16 %v152
  %v657 = vunpack.c.l.b16 %v153
  %v658 = vunpack.c.h.b16 %v153
  %v659 = vunpack.c.l.b16 %v154
  %v660 = vunpack.c.h.b16 %v154
  %v661 = vunpack.c.l.b16 %v155
  %v662 = vunpack.c.h.b16 %v155
  %v663 = vunpack.c.l.b16 %v156
  %v664 = vunpack.c.h.b16 %v156
  %v665 = vunpack.c.l.b16 %v157
  %v666 = vunpack.c.h.b16 %v157
  %v667 = vunpack.c.l.b16 %v158
  %v668 = vunpack.c.h.b16 %v158
  %v669 = vunpack.c.l.b16 %v159
  %v670 = vunpack.c.h.b16 %v159
  %v671 = vunpack.c.l.b16 %v160
  %v672 = vunpack.c.h.b16 %v160
  %v673 = vunpack.c.l.b16 %v161
  %v674 = vunpack.c.h.b16 %v161
  %v675 = vunpack.c.l.b16 %v162
  %v676 = vunpack.c.h.b16 %v162
  %v677 = vunpack.c.l.b16 %v163
  %v678 = vunpack.c.h.b16 %v163
  %v679 = vunpack.c.l.b16 %v164
  %v680 = vunpack.c.h.b16 %v164
  %v681 = vunpack.c.l.b16 %v165
  %v682 = vunpack.c.h.b16 %v165
  %v683 = vunpack.c.l.b16 %v166
  %v684 = vunpack.c.h.b16 %v166
  %v685 = vunpack.c.l.b16 %v167
  %v686 = vunpack.c.h.b16 %v167
  %v687 = vunpack.c.l.b16 %v168
  %v688 = vunpack.c.h.b16 %v168
  %v689 = vunpack.c.l.b16 %v169
  %v690 = vunpack.c.h.b16 %v169
  %v691 = vunpack.c.l.b16 %v170
  %v692 = vunpack.c.h.b16 %v170
  %v693 = vunpack.c.l.b16 %v171
  %v694 = vunpack.c.h.b16 %v171
  %v695 = vunpack.c.l.b16 %v172
  %v696 = vunpack.c.h.b16 %v172
  %v697 = vunpack.c.l.b16 %v173
  %v698 = vunpack.c.h.b16 %v173
  %v699 = vunpack.c.l.b16 %v174
  %v700 = vunpack.c.h.b16 %v174
  %v701 = vunpack.c.l.b16 %v175
  %v702 = vunpack.c.h.b16 %v175
  %v703 = vunpack.c.l.b16 %v176
  %v704 = vunpack.c.h.b16 %v176
  %v705 = vunpack.c.l.b16 %v177
  %v706 = vunpack.c.h.b16 %v177
  %v707 = vunpack.c.l.b16 %v178
  %v708 = vunpack.c.h.b16 %v178
  %v709 = vunpack.c.l.b16 %v179
  %v710 = vunpack.c.h.b16 %v179
  %v711 = vunpack.c.l.b16 %v180
  %v712 = vunpack.c.h.b16 %v180
  %v713 = vunpack.c.l.b16 %v181
  %v714 = vunpack.c.h.b16 %v181
  %v715 = vunpack.c.l.b16 %v182
  %v716 = vunpack.c.h.b16 %v182
  %v717 = vunpack.c.l.b16 %v183
  %v718 = vunpack.c.h.b16 %v183
  %v719 = vunpack.c.l.b16 %v184
  %v720 = vunpack.c.h.b16 %v184
  %v721 = vunpack.c.l.b16 %v185
  %v722 = vunpack.c.h.b16 %v185
  %v723 = vunpack.c.l.b16 %v186
  %v724 = vunpack.c.h.b16 %v186
  %v725 = vunpack.c.l.b16 %v187
  %v726 = vunpack.c.h.b16 %v187
  %v727 = vunpack.c.l.b16 %v188
  %v728 = vunpack.c.h.b16 %v188
  %v729 = vunpack.c.l.b16 %v189
  %v730 = vunpack.c.h.b16 %v189
  %v731 = vunpack.c.l.b16 %v190
  %v732 = vunpack.c.h.b16 %v190
  %v733 = vunpack.c.l.b16 %v191
  %v734 = vunpack.c.h.b16 %v191
  %v735 = vunpack.c.l.b16 %v192
  %v736 = vunpack.c.h.b16 %v192
  %v737 = vunpack.c.l.b16 %v193
  %v738 = vunpack.c.h.b16 %v193
  %v739 = vunpack.c.l.b16 %v194
  %v740 = vunpack.c.h.b16 %v194
  %v741 = vunpack.c.l.b16 %v195
  %v742 = vunpack.c.h.b16 %v195
  %v743 = vunpack.c.l.b16 %v196
  %v744 = vunpack.c.h.b16 %v196
  %v745 = vunpack.c.l.b16 %v197
  %v746 = vunpack.c.h.b16 %v197
  %v747 = vunpack.c.l.b16 %v198
  %v748 = vunpack.c.h.b16 %v198
  %v749 = vunpack.c.l.b16 %v199
  %v750 = vunpack.c.h.b16 %v199
  %v751 = vunpack.c.l.b16 %v200
  %v752 = vunpack.c.h.b16 %v200
  %v753 = vunpack.c.l.b16 %v201
  %v754 = vunpack.c.h.b16 %v201
  %v755 = vunpack.c.l.b16 %v202
  %v756 = vunpack.c.h.b16 %v202
  %v757 = vunpack.c.l.b16 %v203
  %v758 = vunpack.c.h.b16 %v203
  %v759 = vunpack.c.l.b16 %v204
  %v760 = vunpack.c.h.b16 %v204
  %v761 = vunpack.c.l.b16 %v205
  %v762 = vunpack.c.h.b16 %v205
  %v763 = vunpack.c.l.b16 %v206
  %v764 = vunpack.c.h.b16 %v206
  %v765 = vunpack.c.l.b16 %v207
  %v766 = vunpack.c.h.b16 %v207
  %v767 = vunpack.c.l.b16 %v208
  %v768 = vunpack.c.h.b16 %v208
  %v769 = vunpack.c.l.b16 %v209
  %v770 = vunpack.c.h.b16 %v209
  %v771 = vunpack.c.l.b16 %v210
  %v772 = vunpack.c.h.b16 %v210
  %v773 = vunpack.c.l.b16 %v211
  %v774 = vunpack.c.h.b16 %v211
  %v775 = vunpack.c.l.b16 %v212
  %v776 = vunpack.c.h.b16 %v212
  %v777 = vunpack.c.l.b16 %v213
  %v778 = vunpack.c.h.b16 %v213
  %v779 = vunpack.c.l.b16 %v214
  %v780 = vunpack.c.h.b16 %v214
  %v781 = vunpack.c.l.b16 %v215
  %v782 = vunpack.c.h.b16 %v215
  %v783 = vunpack.c.l.b16 %v216
  %v784 = vunpack.c.h.b16 %v216
  %v785 = vunpack.c.l.b16 %v217
  %v786 = vunpack.c.h.b16 %v217
  %v787 = vunpack.c.l.b16 %v218
  %v788 = vunpack.c.h.b16 %v218
  %v789 = vunpack.c.l.b16 %v219
  %v790 = vunpack.c.h.b16 %v219
  %v791 = vunpack.c.l.b16 %v220
  %v792 = vunpack.c.h.b16 %v220
  %v793 = vunpack.c.l.b16 %v221
  %v794 = vunpack.c.h.b16 %v221
  %v795 = vunpack.c.l.b16 %v222
  %v796 = vunpack.c.h.b16 %v222
  %v797 = vunpack.c.l.b16 %v223
  %v798 = vunpack.c.h.b16 %v223
  %v799 = vunpack.c.l.b16 %v224
  %v800 = vunpack.c.h.b16 %v224
  %v801 = vpack.c.b16 %v421, %v417
  %v802 = vpack.c.b16 %v422, %v418
  %v803 = vpack.c.b16 %v423, %v419
  %v804 = vpack.c.b16 %v424, %v420
  %v805 = vpack.c.b16 %v429, %v425
  %v806 = vpack.c.b16 %v430, %v426
  %v807 = vpack.c.b16 %v431, %v427
  %v808 = vpack.c.b16 %v432, %v428
  %v809 = vpack.c.b16 %v437, %v433
  %v810 = vpack.c.b16 %v438, %v434
  %v811 = vpack.c.b16 %v439, %v435
  %v812 = vpack.c.b16 %v440, %v436
  %v813 = vpack.c.b16 %v445, %v441
  %v814 = vpack.c.b16 %v446, %v442
  %v815 = vpack.c.b16 %v447, %v443
  %v816 = vpack.c.b16 %v448, %v444
  %v817 = vpack.c.b16 %v453, %v449
  %v818 = vpack.c.b16 %v454, %v450
  %v819 = vpack.c.b16 %v455, %v451
  %v820 = vpack.c.b16 %v456, %v452
  %v821 = vpack.c.b16 %v461, %v457
  %v822 = vpack.c.b16 %v462, %v458
  %v823 = vpack.c.b16 %v463, %v459
  %v824 = vpack.c.b16 %v464, %v460
  %v825 = vpack.c.b16 %v469, %v465
  %v826 = vpack.c.b16 %v470, %v466
  %v827 = vpack.c.b16 %v471, %v467
  %v828 = vpack.c.b16 %v472, %v468
  %v829 = vpack.c.b16 %v477, %v473
  %v830 = vpack.c.b16 %v478, %v474
  %v831 = vpack.c.b16 %v479, %v475
  %v832 = vpack.c.b16 %v480, %v476
  %v833 = vpack.c.b16 %v485, %v481
  %v834 = vpack.c.b16 %v486, %v482
  %v835 = vpack.c.b16 %v487, %v483
  %v836 = vpack.c.b16 %v488, %v484
  %v837 = vpack.c.b16 %v493, %v489
  %v838 = vpack.c.b16 %v494, %v490
  %v839 = vpack.c.b16 %v495, %v491
  %v840 = vpack.c.b16 %v496, %v492
  %v841 = vpack.c.b16 %v501, %v497
  %v842 = vpack.c.b16 %v502, %v498
  %v843 = vpack.c.b16 %v503, %v499
  %v844 = vpack.c.b16 %v504, %v500
  %v845 = vpack.c.b16 %v509, %v505
  %v846 = vpack.c.b16 %v510, %v506
  %v847 = vpack.c.b16 %v511, %v507
  %v848 = vpack.c.b16 %v512, %v508
  %v849 = vpack.c.b16 %v517, %v513
  %v850 = vpack.c.b16 %v518, %v514
  %v851 = vpack.c.b16 %v519, %v515
  %v852 = vpack.c.b16 %v520, %v516
  %v853 = vpack.c.b16 %v525, %v521
  %v854 = vpack.c.b16 %v526, %v522
  %v855 = vpack.c.b16 %v527, %v523
  %v856 = vpack.c.b16 %v528, %v524
  %v857 = vpack.c.b16 %v533, %v529
  %v858 = vpack.c.b16 %v534, %v530
  %v859 = vpack.c.b16 %v535, %v531
  %v860 = vpack.c.b16 %v536, %v532
  %v861 = vpack.c.b16 %v541, %v537
  %v862 = vpack.c.b16 %v542, %v538
  %v863 = vpack.c.b16 %v543, %v539
  %v864 = vpack.c.b16 %v544, %v540
  %v865 = vpack.c.b16 %v549, %v545
  %v866 = vpack.c.b16 %v550, %v546
  %v867 = vpack.c.b16 %v551, %v547
  %v868 = vpack.c.b16 %v552, %v548
  %v869 = vpack.c.b16 %v557, %v553
  %v870 = vpack.c.b16 %v558, %v554
  %v871 = vpack.c.b16 %v559, %v555
  %v872 = vpack.c.b16 %v560, %v556
  %v873 = vpack.c.b16 %v565, %v561
  %v874 = vpack.c.b16 %v566, %v562
  %v875 = vpack.c.b16 %v567, %v563
  %v876 = vpack.c.b16 %v568, %v564
  %v877 = vpack.c.b16 %v573, %v569
  %v878 = vpack.c.b16 %v574, %v570
  %v879 = vpack.c.b16 %v575, %v571
  %v880 = vpack.c.b16 %v576, %v572
  %v881 = vpack.c.b16 %v581, %v577
  %v882 = vpack.c.b16 %v582, %v578
  %v883 = vpack.c.b16 %v583, %v579
  %v884 = vpack.c.b16 %v584, %v580
  %v885 = vpack.c.b16 %v589, %v585
  %v886 = vpack.c.b16 %v590, %v586
  %v887 = vpack.c.b16 %v591, %v587
  %v888 = vpack.c.b16 %v592, %v588
  %v889 = vpack.c.b16 %v597, %v593
  %v890 = vpack.c.b16 %v598, %v594
  %v891 = vpack.c.b16 %v599, %v595
  %v892 = vpack.c.b16 %v600, %v596
  %v893 = vpack.c.b16 %v605, %v601
  %v894 = vpack.c.b16 %v606, %v602
  %v895 = vpack.c.b16 %v607, %v603
  %v896 = vpack.c.b16 %v608, %v604
  %v897 = vpack.c.b16 %v613, %v609
  %v898 = vpack.c.b16 %v614, %v610
  %v899 = vpack.c.b16 %v615, %v611
  %v900 = vpack.c.b16 %v616, %v612
  %v901 = vpack.c.b16 %v621, %v617
  %v902 = vpack.c.b16 %v622, %v618
  %v903 = vpack.c.b16 %v623, %v619
  %v904 = vpack.c.b16 %v624, %v620
  %v905 = vpack.c.b16 %v629, %v625
  %v906 = vpack.c.b16 %v630, %v626
  %v907 = vpack.c.b16 %v631, %v627
  %v908 = vpack.c.b16 %v632, %v628
  %v909 = vpack.c.b16 %v637, %v633
  %v910 = vpack.c.b16 %v638, %v634
  %v911 = vpack.c.b16 %v639, %v635
  %v912 = vpack.c.b16 %v640, %v636
  %v913 = vpack.c.b16 %v645, %v641
  %v914 = vpack.c.b16 %v646, %v642
  %v915 = vpack.c.b16 %v647, %v643
  %v916 = vpack.c.b16 %v648, %v644
  %v917 = vpack.c.b16 %v653, %v649
  %v918 = vpack.c.b16 %v654, %v650
  %v919 = vpack.c.b16 %v655, %v651
  %v920 = vpack.c.b16 %v656, %v652
  %v921 = vpack.c.b16 %v661, %v657
  %v922 = vpack.c.b16 %v662, %v658
  %v923 = vpack.c.b16 %v663, %v659
  %v924 = vpack.c.b16 %v664, %v660
  %v925 = vpack.c.b16 %v669, %v665
  %v926 = vpack.c.b16 %v670, %v666
  %v927 = vpack.c.b16 %v671, %v667
  %v928 = vpack.c.b16 %v672, %v668
  %v929 = vpack.c.b16 %v677, %v673
  %v930 = vpack.c.b16 %v678, %v674
  %v931 = vpack.c.b16 %v679, %v675
  %v932 = vpack.c.b16 %v680, %v676
  %v933 = vpack.c.b16 %v685, %v681
  %v934 = vpack.c.b16 %v686, %v682
  %v935 = vpack.c.b16 %v687, %v683
  %v936 = vpack.c.b16 %v688, %v684
  %v937 = vpack.c.b16 %v693, %v689
  %v938 = vpack.c.b16 %v694, %v690
  %v939 = vpack.c.b16 %v695, %v691
  %v940 = vpack.c.b16 %v696, %v692
  %v941 = vpack.c.b16 %v701, %v697
  %v942 = vpack.c.b16 %v702, %v698
  %v943 = vpack.c.b16 %v703, %v699
  %v944 = vpack.c.b16 %v704, %v700
  %v945 = vpack.c.b16 %v709, %v705
  %v946 = vpack.c.b16 %v710, %v706
  %v947 = vpack.c.b16 %v711, %v707
  %v948 = vpack.c.b16 %v712, %v708
  %v949 = vpack.c.b16 %v717, %v713
  %v950 = vpack.c.b16 %v718, %v714
  %v951 = vpack.c.b16 %v719, %v715
  %v952 = vpack.c.b16 %v720, %v716
  %v953 = vpack.c.b16 %v725, %v721
  %v954 = vpack.c.b16 %v726, %v722
  %v955 = vpack.c.b16 %v727, %v723
  %v956 = vpack.c.b16 %v728, %v724
  %v957 = vpack.c.b16 %v733, %v729
  %v958 = vpack.c.b16 %v734, %v730
  %v959 = vpack.c.b16 %v735, %v731
  %v960 = vpack.c.b16 %v736, %v732
  %v961 = vpack.c.b16 %v741, %v737
  %v962 = vpack.c.b16 %v742, %v738
  %v963 = vpack.c.b16 %v743, %v739
  %v964 = vpack.c.b16 %v744, %v740
  %v965 = vpack.c.b16 %v749, %v745
  %v966 = vpack.c.b16 %v750, %v746
  %v967 = vpack.c.b16 %v751, %v747
  %v968 = vpack.c.b16 %v752, %v748
  %v969 = vpack.c.b16 %v757, %v753
  %v970 = vpack.c.b16 %v758, %v754
  %v971 = vpack.c.b16 %v759, %v755
  %v972 = vpack.c.b16 %v760, %v756
  %v973 = vpack.c.b16 %v765, %v761
  %v974 = vpack.c.b16 %v766, %v762
  %v975 = vpack.c.b16 %v767, %v763
  %v976 = vpack.c.b16 %v768, %v764
  %v977 = vpack.c.b16 %v773, %v769
  %v978 = vpack.c.b16 %v774, %v770
  %v979 = vpack.c.b16 %v775, %v771
  %v980 = vpack.c.b16 %v776, %v772
  %v981 = vpack.c.b16 %v781, %v777
  %v982 = vpack.c.b16 %v782, %v778
  %v983 = vpack.c.b16 %v783, %v779
  %v984 = vpack.c.b16 %v784, %v780
  %v985 = vpack.c.b16 %v789, %v785
  %v986 = vpack.c.b16 %v790, %v786
  %v987 = vpack.c.b16 %v791, %v787
  %v988 = vpack.c.b16 %v792, %v788
  %v989 = vpack.c.b16 %v797, %v793
  %v990 = vpack.c.b16 %v798, %v794
  %v991 = vpack.c.b16 %v799, %v795
  %v992 = vpack.c.b16 %v800, %v796
  %1185 = vmatprep.subr.bf16.mxu0 %v802
  %1186 = vmatpush1.bf16.msra.mxu0 %v801
  %1187 = vmatprep.subr.bf16.mxu0 %v806
  %1188 = vmatpush1.bf16.msra.mxu0 %v805
  %1189 = vmatprep.subr.bf16.mxu0 %v810
  %1190 = vmatpush1.bf16.msra.mxu0 %v809
  %1191 = vmatprep.subr.bf16.mxu0 %v814
  %1192 = vmatpush1.bf16.msra.mxu0 %v813
  %1193 = vmatprep.subr.bf16.mxu0 %v818
  %1194 = vmatpush1.bf16.msra.mxu0 %v817
  %1195 = vmatprep.subr.bf16.mxu0 %v822
  %1196 = vmatpush1.bf16.msra.mxu0 %v821
  %1197 = vmatprep.subr.bf16.mxu0 %v826
  %1198 = vmatpush1.bf16.msra.mxu0 %v825
  %1199 = vmatprep.subr.bf16.mxu0 %v830
  %1200 = vmatpush1.bf16.msra.mxu0 %v829
  %1201 = vmatprep.subr.bf16.mxu0 %v834
  %1202 = vmatpush1.bf16.msra.mxu0 %v833
  %1203 = vmatprep.subr.bf16.mxu0 %v838
  %1204 = vmatpush1.bf16.msra.mxu0 %v837
  %1205 = vmatprep.subr.bf16.mxu0 %v842
  %1206 = vmatpush1.bf16.msra.mxu0 %v841
  %1207 = vmatprep.subr.bf16.mxu0 %v846
  %1208 = vmatpush1.bf16.msra.mxu0 %v845
  %1209 = vmatprep.subr.bf16.mxu0 %v850
  %1210 = vmatpush1.bf16.msra.mxu0 %v849
  %1211 = vmatprep.subr.bf16.mxu0 %v854
  %1212 = vmatpush1.bf16.msra.mxu0 %v853
  %1213 = vmatprep.subr.bf16.mxu0 %v858
  %1214 = vmatpush1.bf16.msra.mxu0 %v857
  %1215 = vmatprep.subr.bf16.mxu0 %v862
  %1216 = vmatpush1.bf16.msra.mxu0 %v861
  %1217 = vmatprep.mubr.bf16.mxu0 %v22
  %1218 = vmatmul.mubr.bf16.gmra.mrb[0].mxu0 %v21
  %v1219 = vpop.f32.mrb[0].mxu0
  %v1220 = vadd.f32 0.0, %v1219
  %v1221 = vpop.f32.mrb[0].mxu0
  %v1222 = vadd.f32 0.0, %v1221
  %v1223 = vpop.f32.mrb[0].mxu0
  %v1224 = vadd.f32 0.0, %v1223
  %v1225 = vpop.f32.mrb[0].mxu0
  %v1226 = vadd.f32 0.0, %v1225
  %1227 = vdwg.mxu0
  %1228 = vmatprep.subr.bf16.mxu0 %v866
  %1229 = vmatpush1.bf16.msra.mxu0 %v865
  %1230 = vmatprep.subr.bf16.mxu0 %v870
  %1231 = vmatpush1.bf16.msra.mxu0 %v869
  %1232 = vmatprep.subr.bf16.mxu0 %v874
  %1233 = vmatpush1.bf16.msra.mxu0 %v873
  %1234 = vmatprep.subr.bf16.mxu0 %v878
  %1235 = vmatpush1.bf16.msra.mxu0 %v877
  %1236 = vmatprep.subr.bf16.mxu0 %v882
  %1237 = vmatpush1.bf16.msra.mxu0 %v881
  %1238 = vmatprep.subr.bf16.mxu0 %v886
  %1239 = vmatpush1.bf16.msra.mxu0 %v885
  %1240 = vmatprep.subr.bf16.mxu0 %v890
  %1241 = vmatpush1.bf16.msra.mxu0 %v889
  %1242 = vmatprep.subr.bf16.mxu0 %v894
  %1243 = vmatpush1.bf16.msra.mxu0 %v893
  %1244 = vmatprep.subr.bf16.mxu0 %v898
  %1245 = vmatpush1.bf16.msra.mxu0 %v897
  %1246 = vmatprep.subr.bf16.mxu0 %v902
  %1247 = vmatpush1.bf16.msra.mxu0 %v901
  %1248 = vmatprep.subr.bf16.mxu0 %v906
  %1249 = vmatpush1.bf16.msra.mxu0 %v905
  %1250 = vmatprep.subr.bf16.mxu0 %v910
  %1251 = vmatpush1.bf16.msra.mxu0 %v909
  %1252 = vmatprep.subr.bf16.mxu0 %v914
  %1253 = vmatpush1.bf16.msra.mxu0 %v913
  %1254 = vmatprep.subr.bf16.mxu0 %v918
  %1255 = vmatpush1.bf16.msra.mxu0 %v917
  %1256 = vmatprep.subr.bf16.mxu0 %v922
  %1257 = vmatpush1.bf16.msra.mxu0 %v921
  %1258 = vmatprep.subr.bf16.mxu0 %v926
  %1259 = vmatpush1.bf16.msra.mxu0 %v925
  %1260 = vmatprep.mubr.bf16.mxu0 %v32
  %1261 = vmatmul.mubr.bf16.gmra.mrb[0].mxu0 %v31
  %v1262 = vpop.f32.mrb[0].mxu0
  %v1263 = vadd.f32 %v1220, %v1262
  %v1264 = vpop.f32.mrb[0].mxu0
  %v1265 = vadd.f32 %v1222, %v1264
  %v1266 = vpop.f32.mrb[0].mxu0
  %v1267 = vadd.f32 %v1224, %v1266
  %v1268 = vpop.f32.mrb[0].mxu0
  %v1269 = vadd.f32 %v1226, %v1268
  %1270 = vdwg.mxu0
  %1271 = vmatprep.subr.bf16.mxu0 %v930
  %1272 = vmatpush1.bf16.msra.mxu0 %v929
  %1273 = vmatprep.subr.bf16.mxu0 %v934
  %1274 = vmatpush1.bf16.msra.mxu0 %v933
  %1275 = vmatprep.subr.bf16.mxu0 %v938
  %1276 = vmatpush1.bf16.msra.mxu0 %v937
  %1277 = vmatprep.subr.bf16.mxu0 %v942
  %1278 = vmatpush1.bf16.msra.mxu0 %v941
  %1279 = vmatprep.subr.bf16.mxu0 %v946
  %1280 = vmatpush1.bf16.msra.mxu0 %v945
  %1281 = vmatprep.subr.bf16.mxu0 %v950
  %1282 = vmatpush1.bf16.msra.mxu0 %v949
  %1283 = vmatprep.subr.bf16.mxu0 %v954
  %1284 = vmatpush1.bf16.msra.mxu0 %v953
  %1285 = vmatprep.subr.bf16.mxu0 %v958
  %1286 = vmatpush1.bf16.msra.mxu0 %v957
  %1287 = vmatprep.subr.bf16.mxu0 %v962
  %1288 = vmatpush1.bf16.msra.mxu0 %v961
  %1289 = vmatprep.subr.bf16.mxu0 %v966
  %1290 = vmatpush1.bf16.msra.mxu0 %v965
  %1291 = vmatprep.subr.bf16.mxu0 %v970
  %1292 = vmatpush1.bf16.msra.mxu0 %v969
  %1293 = vmatprep.subr.bf16.mxu0 %v974
  %1294 = vmatpush1.bf16.msra.mxu0 %v973
  %1295 = vmatprep.subr.bf16.mxu0 %v978
  %1296 = vmatpush1.bf16.msra.mxu0 %v977
  %1297 = vmatprep.subr.bf16.mxu0 %v982
  %1298 = vmatpush1.bf16.msra.mxu0 %v981
  %1299 = vmatprep.subr.bf16.mxu0 %v986
  %1300 = vmatpush1.bf16.msra.mxu0 %v985
  %1301 = vmatprep.subr.bf16.mxu0 %v990
  %1302 = vmatpush1.bf16.msra.mxu0 %v989
  %1303 = vmatprep.mubr.bf16.mxu0 %v22
  %1304 = vmatmul.mubr.bf16.gmra.mrb[0].mxu0 %v21
  %v1305 = vpop.f32.mrb[0].mxu0
  %v1306 = vadd.f32 %v1263, %v1305
  %v1307 = vpop.f32.mrb[0].mxu0
  %v1308 = vadd.f32 %v1265, %v1307
  %v1309 = vpop.f32.mrb[0].mxu0
  %v1310 = vadd.f32 %v1267, %v1309
  %v1311 = vpop.f32.mrb[0].mxu0
  %v1312 = vadd.f32 %v1269, %v1311
  %1313 = vdwg.mxu0
  %1314 = vmatprep.subr.bf16.mxu0 %v804
  %1315 = vmatpush1.bf16.msra.mxu0 %v803
  %1316 = vmatprep.subr.bf16.mxu0 %v808
  %1317 = vmatpush1.bf16.msra.mxu0 %v807
  %1318 = vmatprep.subr.bf16.mxu0 %v812
  %1319 = vmatpush1.bf16.msra.mxu0 %v811
  %1320 = vmatprep.subr.bf16.mxu0 %v816
  %1321 = vmatpush1.bf16.msra.mxu0 %v815
  %1322 = vmatprep.subr.bf16.mxu0 %v820
  %1323 = vmatpush1.bf16.msra.mxu0 %v819
  %1324 = vmatprep.subr.bf16.mxu0 %v824
  %1325 = vmatpush1.bf16.msra.mxu0 %v823
  %1326 = vmatprep.subr.bf16.mxu0 %v828
  %1327 = vmatpush1.bf16.msra.mxu0 %v827
  %1328 = vmatprep.subr.bf16.mxu0 %v832
  %1329 = vmatpush1.bf16.msra.mxu0 %v831
  %1330 = vmatprep.subr.bf16.mxu0 %v836
  %1331 = vmatpush1.bf16.msra.mxu0 %v835
  %1332 = vmatprep.subr.bf16.mxu0 %v840
  %1333 = vmatpush1.bf16.msra.mxu0 %v839
  %1334 = vmatprep.subr.bf16.mxu0 %v844
  %1335 = vmatpush1.bf16.msra.mxu0 %v843
  %1336 = vmatprep.subr.bf16.mxu0 %v848
  %1337 = vmatpush1.bf16.msra.mxu0 %v847
  %1338 = vmatprep.subr.bf16.mxu0 %v852
  %1339 = vmatpush1.bf16.msra.mxu0 %v851
  %1340 = vmatprep.subr.bf16.mxu0 %v856
  %1341 = vmatpush1.bf16.msra.mxu0 %v855
  %1342 = vmatprep.subr.bf16.mxu0 %v860
  %1343 = vmatpush1.bf16.msra.mxu0 %v859
  %1344 = vmatprep.subr.bf16.mxu0 %v864
  %1345 = vmatpush1.bf16.msra.mxu0 %v863
  %1346 = vmatprep.mubr.bf16.mxu0 %v22
  %1347 = vmatmul.mubr.bf16.gmra.mrb[0].mxu0 %v21
  %v1348 = vpop.f32.mrb[0].mxu0
  %v1349 = vadd.f32 0.0, %v1348
  %v1350 = vpop.f32.mrb[0].mxu0
  %v1351 = vadd.f32 0.0, %v1350
  %v1352 = vpop.f32.mrb[0].mxu0
  %v1353 = vadd.f32 0.0, %v1352
  %v1354 = vpop.f32.mrb[0].mxu0
  %v1355 = vadd.f32 0.0, %v1354
  %1356 = vdwg.mxu0
  %1357 = vmatprep.subr.bf16.mxu0 %v868
  %1358 = vmatpush1.bf16.msra.mxu0 %v867
  %1359 = vmatprep.subr.bf16.mxu0 %v872
  %1360 = vmatpush1.bf16.msra.mxu0 %v871
  %1361 = vmatprep.subr.bf16.mxu0 %v876
  %1362 = vmatpush1.bf16.msra.mxu0 %v875
  %1363 = vmatprep.subr.bf16.mxu0 %v880
  %1364 = vmatpush1.bf16.msra.mxu0 %v879
  %1365 = vmatprep.subr.bf16.mxu0 %v884
  %1366 = vmatpush1.bf16.msra.mxu0 %v883
  %1367 = vmatprep.subr.bf16.mxu0 %v888
  %1368 = vmatpush1.bf16.msra.mxu0 %v887
  %1369 = vmatprep.subr.bf16.mxu0 %v892
  %1370 = vmatpush1.bf16.msra.mxu0 %v891
  %1371 = vmatprep.subr.bf16.mxu0 %v896
  %1372 = vmatpush1.bf16.msra.mxu0 %v895
  %1373 = vmatprep.subr.bf16.mxu0 %v900
  %1374 = vmatpush1.bf16.msra.mxu0 %v899
  %1375 = vmatprep.subr.bf16.mxu0 %v904
  %1376 = vmatpush1.bf16.msra.mxu0 %v903
  %1377 = vmatprep.subr.bf16.mxu0 %v908
  %1378 = vmatpush1.bf16.msra.mxu0 %v907
  %1379 = vmatprep.subr.bf16.mxu0 %v912
  %1380 = vmatpush1.bf16.msra.mxu0 %v911
  %1381 = vmatprep.subr.bf16.mxu0 %v916
  %1382 = vmatpush1.bf16.msra.mxu0 %v915
  %1383 = vmatprep.subr.bf16.mxu0 %v920
  %1384 = vmatpush1.bf16.msra.mxu0 %v919
  %1385 = vmatprep.subr.bf16.mxu0 %v924
  %1386 = vmatpush1.bf16.msra.mxu0 %v923
  %1387 = vmatprep.subr.bf16.mxu0 %v928
  %1388 = vmatpush1.bf16.msra.mxu0 %v927
  %1389 = vmatprep.mubr.bf16.mxu0 %v32
  %1390 = vmatmul.mubr.bf16.gmra.mrb[0].mxu0 %v31
  %v1391 = vpop.f32.mrb[0].mxu0
  %v1392 = vadd.f32 %v1349, %v1391
  %v1393 = vpop.f32.mrb[0].mxu0
  %v1394 = vadd.f32 %v1351, %v1393
  %v1395 = vpop.f32.mrb[0].mxu0
  %v1396 = vadd.f32 %v1353, %v1395
  %v1397 = vpop.f32.mrb[0].mxu0
  %v1398 = vadd.f32 %v1355, %v1397
  %1399 = vdwg.mxu0
  %1400 = vmatprep.subr.bf16.mxu0 %v932
  %1401 = vmatpush1.bf16.msra.mxu0 %v931
  %1402 = vmatprep.subr.bf16.mxu0 %v936
  %1403 = vmatpush1.bf16.msra.mxu0 %v935
  %1404 = vmatprep.subr.bf16.mxu0 %v940
  %1405 = vmatpush1.bf16.msra.mxu0 %v939
  %1406 = vmatprep.subr.bf16.mxu0 %v944
  %1407 = vmatpush1.bf16.msra.mxu0 %v943
  %1408 = vmatprep.subr.bf16.mxu0 %v948
  %1409 = vmatpush1.bf16.msra.mxu0 %v947
  %1410 = vmatprep.subr.bf16.mxu0 %v952
  %1411 = vmatpush1.bf16.msra.mxu0 %v951
  %1412 = vmatprep.subr.bf16.mxu0 %v956
  %1413 = vmatpush1.bf16.msra.mxu0 %v955
  %1414 = vmatprep.subr.bf16.mxu0 %v960
  %1415 = vmatpush1.bf16.msra.mxu0 %v959
  %1416 = vmatprep.subr.bf16.mxu0 %v964
  %1417 = vmatpush1.bf16.msra.mxu0 %v963
  %1418 = vmatprep.subr.bf16.mxu0 %v968
  %1419 = vmatpush1.bf16.msra.mxu0 %v967
  %1420 = vmatprep.subr.bf16.mxu0 %v972
  %1421 = vmatpush1.bf16.msra.mxu0 %v971
  %1422 = vmatprep.subr.bf16.mxu0 %v976
  %1423 = vmatpush1.bf16.msra.mxu0 %v975
  %1424 = vmatprep.subr.bf16.mxu0 %v980
  %1425 = vmatpush1.bf16.msra.mxu0 %v979
  %1426 = vmatprep.subr.bf16.mxu0 %v984
  %1427 = vmatpush1.bf16.msra.mxu0 %v983
  %1428 = vmatprep.subr.bf16.mxu0 %v988
  %1429 = vmatpush1.bf16.msra.mxu0 %v987
  %1430 = vmatprep.subr.bf16.mxu0 %v992
  %1431 = vmatpush1.bf16.msra.mxu0 %v991
  %1432 = vmatprep.mubr.bf16.mxu0 %v22
  %1433 = vmatmul.mubr.bf16.gmra.mrb[0].mxu0 %v21
  %v1434 = vpop.f32.mrb[0].mxu0
  %v1435 = vadd.f32 %v1392, %v1434
  %v1436 = vpop.f32.mrb[0].mxu0
  %v1437 = vadd.f32 %v1394, %v1436
  %v1438 = vpop.f32.mrb[0].mxu0
  %v1439 = vadd.f32 %v1396, %v1438
  %v1440 = vpop.f32.mrb[0].mxu0
  %v1441 = vadd.f32 %v1398, %v1440
  %1442 = vdwg.mxu0
  %v1443 = vmul.f32 %v1306, %v1310
  %v1444 = vmul.f32 %v1308, %v1312
  %v1445 = vmul.f32 %v1435, %v1439
  %v1446 = vmul.f32 %v1437, %v1441
  %v1447 = vadd.f32 %v1443, %v1445
  %v1448 = vadd.f32 %v1444, %v1446
  %v1449 = vmul.f32 %v1435, %v1310
  %v1450 = vmul.f32 %v1437, %v1312
  %v1451 = vmul.f32 %v1306, %v1439
  %v1452 = vmul.f32 %v1308, %v1441
  %v1453 = vsub.f32 %v1449, %v1451
  %v1454 = vsub.f32 %v1450, %v1452
  %v1455 = vmul.f32 %v1306, %v1306
  %v1456 = vmul.f32 %v1308, %v1308
  %v1457 = vmul.f32 %v1435, %v1435
  %v1458 = vmul.f32 %v1437, %v1437
  %v1459 = vadd.f32 %v1455, %v1457
  %v1460 = vadd.f32 %v1456, %v1458
  %v1461 = vmul.f32 %v1310, %v1310
  %v1462 = vmul.f32 %v1312, %v1312
  %v1463 = vmul.f32 %v1439, %v1439
  %v1464 = vmul.f32 %v1441, %v1441
  %v1465 = vadd.f32 %v1461, %v1463
  %v1466 = vadd.f32 %v1462, %v1464
  %v1467 = vld [vmem:[%s3] sm:$0xff]
  %v1468 = vld [vmem:[%s3 + $0x8] sm:$0xff]
  %v1469 = vld [vmem:[%s3 + $0x10] sm:$0xff]
  %v1470 = vld [vmem:[%s3 + $0x18] sm:$0xff]
  %v1471 = vld [vmem:[%s3 + $0x20] sm:$0xff]
  %v1472 = vld [vmem:[%s3 + $0x28] sm:$0xff]
  %v1473 = vld [vmem:[%s3 + $0x30] sm:$0xff]
  %v1474 = vld [vmem:[%s3 + $0x38] sm:$0xff]
  %v1475 = vld [vmem:[%s3 + $0x40] sm:$0xff]
  %v1476 = vld [vmem:[%s3 + $0x48] sm:$0xff]
  %v1477 = vld [vmem:[%s3 + $0x50] sm:$0xff]
  %v1478 = vld [vmem:[%s3 + $0x58] sm:$0xff]
  %v1479 = vld [vmem:[%s3 + $0x60] sm:$0xff]
  %v1480 = vld [vmem:[%s3 + $0x68] sm:$0xff]
  %v1481 = vld [vmem:[%s3 + $0x70] sm:$0xff]
  %v1482 = vld [vmem:[%s3 + $0x78] sm:$0xff]
  %v1483 = vld [vmem:[%s3 + $0x80] sm:$0xff]
  %v1484 = vld [vmem:[%s3 + $0x88] sm:$0xff]
  %v1485 = vld [vmem:[%s3 + $0x90] sm:$0xff]
  %v1486 = vld [vmem:[%s3 + $0x98] sm:$0xff]
  %v1487 = vld [vmem:[%s3 + $0xa0] sm:$0xff]
  %v1488 = vld [vmem:[%s3 + $0xa8] sm:$0xff]
  %v1489 = vld [vmem:[%s3 + $0xb0] sm:$0xff]
  %v1490 = vld [vmem:[%s3 + $0xb8] sm:$0xff]
  %v1491 = vld [vmem:[%s3 + $0xc0] sm:$0xff]
  %v1492 = vld [vmem:[%s3 + $0xc8] sm:$0xff]
  %v1493 = vld [vmem:[%s3 + $0xd0] sm:$0xff]
  %v1494 = vld [vmem:[%s3 + $0xd8] sm:$0xff]
  %v1495 = vld [vmem:[%s3 + $0xe0] sm:$0xff]
  %v1496 = vld [vmem:[%s3 + $0xe8] sm:$0xff]
  %v1497 = vld [vmem:[%s3 + $0xf0] sm:$0xff]
  %v1498 = vld [vmem:[%s3 + $0xf8] sm:$0xff]
  %1499 = vmatprep.subr.mxu0 0.0
  %1500 = vmatpush1.msra.mxu0 %v1467
  %1501 = vmatprep.subr.mxu0 0.0
  %1502 = vmatpush1.msra.mxu0 %v1468
  %1503 = vmatprep.subr.mxu0 0.0
  %1504 = vmatpush1.msra.mxu0 %v1469
  %1505 = vmatprep.subr.mxu0 0.0
  %1506 = vmatpush1.msra.mxu0 %v1470
  %1507 = vmatprep.subr.mxu0 0.0
  %1508 = vmatpush1.msra.mxu0 %v1471
  %1509 = vmatprep.subr.mxu0 0.0
  %1510 = vmatpush1.msra.mxu0 %v1472
  %1511 = vmatprep.subr.mxu0 0.0
  %1512 = vmatpush1.msra.mxu0 %v1473
  %1513 = vmatprep.subr.mxu0 0.0
  %1514 = vmatpush1.msra.mxu0 %v1474
  %1515 = vmatprep.subr.mxu0 0.0
  %1516 = vmatpush1.msra.mxu0 %v1475
  %1517 = vmatprep.subr.mxu0 0.0
  %1518 = vmatpush1.msra.mxu0 %v1476
  %1519 = vmatprep.subr.mxu0 0.0
  %1520 = vmatpush1.msra.mxu0 %v1477
  %1521 = vmatprep.subr.mxu0 0.0
  %1522 = vmatpush1.msra.mxu0 %v1478
  %1523 = vmatprep.subr.mxu0 0.0
  %1524 = vmatpush1.msra.mxu0 %v1479
  %1525 = vmatprep.subr.mxu0 0.0
  %1526 = vmatpush1.msra.mxu0 %v1480
  %1527 = vmatprep.subr.mxu0 0.0
  %1528 = vmatpush1.msra.mxu0 %v1481
  %1529 = vmatprep.subr.mxu0 0.0
  %1530 = vmatpush1.msra.mxu0 %v1482
  %1531 = vmatprep.subr.mxu0 0.0
  %1532 = vmatpush1.msra.mxu0 %v1483
  %1533 = vmatprep.subr.mxu0 0.0
  %1534 = vmatpush1.msra.mxu0 %v1484
  %1535 = vmatprep.subr.mxu0 0.0
  %1536 = vmatpush1.msra.mxu0 %v1485
  %1537 = vmatprep.subr.mxu0 0.0
  %1538 = vmatpush1.msra.mxu0 %v1486
  %1539 = vmatprep.subr.mxu0 0.0
  %1540 = vmatpush1.msra.mxu0 %v1487
  %1541 = vmatprep.subr.mxu0 0.0
  %1542 = vmatpush1.msra.mxu0 %v1488
  %1543 = vmatprep.subr.mxu0 0.0
  %1544 = vmatpush1.msra.mxu0 %v1489
  %1545 = vmatprep.subr.mxu0 0.0
  %1546 = vmatpush1.msra.mxu0 %v1490
  %1547 = vmatprep.subr.mxu0 0.0
  %1548 = vmatpush1.msra.mxu0 %v1491
  %1549 = vmatprep.subr.mxu0 0.0
  %1550 = vmatpush1.msra.mxu0 %v1492
  %1551 = vmatprep.subr.mxu0 0.0
  %1552 = vmatpush1.msra.mxu0 %v1493
  %1553 = vmatprep.subr.mxu0 0.0
  %1554 = vmatpush1.msra.mxu0 %v1494
  %1555 = vmatprep.subr.mxu0 0.0
  %1556 = vmatpush1.msra.mxu0 %v1495
  %1557 = vmatprep.subr.mxu0 0.0
  %1558 = vmatpush1.msra.mxu0 %v1496
  %1559 = vmatprep.subr.mxu0 0.0
  %1560 = vmatpush1.msra.mxu0 %v1497
  %1561 = vmatprep.subr.mxu0 0.0
  %1562 = vmatpush1.msra.mxu0 %v1498
  %1563 = vmatprep.mubr.f32.mxu0 %v1448
  %1564 = vmatmul.mubr.f32.gmra.mrb[0].mxu0 %v1447
  %v1565 = vpop.f32.mrb[0].mxu0
  %v1566 = vadd.f32 0.0, %v1565
  %v1567 = vpop.f32.mrb[0].mxu0
  %1568 = vmatprep.mubr.f32.mxu0 %v1454
  %1569 = vmatmul.mubr.f32.gmra.mrb[0].mxu0 %v1453
  %v1570 = vpop.f32.mrb[0].mxu0
  %v1571 = vadd.f32 0.0, %v1570
  %v1572 = vpop.f32.mrb[0].mxu0
  %1573 = vmatprep.mubr.f32.mxu0 %v1460
  %1574 = vmatmul.mubr.f32.gmra.mrb[0].mxu0 %v1459
  %v1575 = vpop.f32.mrb[0].mxu0
  %v1576 = vadd.f32 0.0, %v1575
  %v1577 = vpop.f32.mrb[0].mxu0
  %1578 = vmatprep.mubr.f32.mxu0 %v1466
  %1579 = vmatmul.mubr.f32.gmra.mrb[0].mxu0 %v1465
  %v1580 = vpop.f32.mrb[0].mxu0
  %v1581 = vadd.f32 0.0, %v1580
  %v1582 = vpop.f32.mrb[0].mxu0
  %1583 = vdwg.mxu0
  %v1584 = vmul.f32 %v1576, %v1581
  %v1585 = vrsqrt.pop %v1584
  %v1586 = vmul.f32 %v1566, %v1585
  %v1587 = vmul.f32 %v1571, %v1585
  %v1588 = vsub.f32 %v1586, 1.0
  %v1589 = vmul.f32 %v1588, %v1588
  %v1590 = vmul.f32 %v1587, %v1587
  %v1591 = vadd.f32 %v1589, %v1590
  %v1592 = vlaneseq
  %v1593 = vand.u32 %v1592, 127
  %vm1594 = vcmp.lt.s32.totalorder %v1593, 3
  %v1595 = vlaneseq
  %v1596 = vshrl.u32 %v1595, 7
  %s1597 = smul.u32 0, 8
  %v1598 = vstv %s1597
  %v1599 = vadd.s32 %v1598, %v1596
  %vm1600 = vcmp.lt.s32.totalorder %v1599, 8
  %v1601 = vsel %vm1594, 1, 0
  %vm1602 = vcmp.eq.s32.totalorder %v1601, 1
  %v1603 = vsel %vm1600, 1, 0
  %vm1604 = vcmp.eq.s32.totalorder %v1603, 1
  %vm1605 = vmand %vm1602, %vm1604
  %v1606 = vsel %vm1605, %v1591, 0.0
  %vm1607 = vcmask 64512
  %1608 = vst.msk [vmem:[%s4] sm:$0xff] %vm1607, %v1606
  // Predicated region
  $region18: #{frc_loss.1} parent=0 // pred_check
    _
  $region19: #{frc_loss.1} parent=0 // pred_check_branch
    %1610 = sbr.rel (0) target = $region21
  $region20: #{frc_loss.1} parent=0 // pred_region
    _
  $region21: #{frc_loss.1} parent=0 // pred_fallthru
    _
  // Predicated region
  $region22: #{frc_loss.1} parent=0 // pred_check
    _
  $region23: #{frc_loss.1} parent=0 // pred_check_branch
    %1612 = sbr.rel (0) target = $region25
  $region24: #{frc_loss.1} parent=0 // pred_region
    _
  $region25: #{frc_loss.1} parent=0 // pred_fallthru
    _

</llo_original>
